<compile_context>
chip_gen: v7x
topology: tpu7x:2x2x1
jax: 0.10.0
libtpu: 0.0.40
codegen_flags: <defaults>
</compile_context>

<pallas_src>
import jax
import jax.numpy as jnp
from jax.experimental import pallas as pl
from jax.experimental.pallas import tpu as pltpu


def _mish(a):
    # mish(x) = x * tanh(softplus(x)); numerically-stable softplus.
    sp = jnp.maximum(a, 0.0) + jnp.log(1.0 + jnp.exp(-jnp.abs(a)))
    return a * jnp.tanh(sp)


def _tcn_kernel(x_ref, w_ref, s_ref, b_ref, o_ref):
    # x_ref: (rows_blk, 3*ci) pre-stacked taps, w_ref: (3*ci, co),
    # s_ref/b_ref: (1, co) folded eval-mode BatchNorm, o_ref: (rows_blk, co).
    y = jnp.dot(x_ref[...], w_ref[...], preferred_element_type=jnp.float32)
    o_ref[...] = _mish(y) * s_ref[...] + b_ref[...]


def _pick_row_grid(rows, max_rows=2048):
    """Largest row block (multiple of 8) <= max_rows, preferring >=2 blocks (megacore)."""
    if rows % 8 != 0:
        return 1, rows                       # full-array block is always legal
    g = max(2, int(pl.cdiv(rows, max_rows)))
    while g <= rows:
        if rows % g == 0 and (rows // g) % 8 == 0:
            return g, rows // g
        g += 1
    return 1, rows


def tcn_forward(x_nchw, params):
    """x: (n, in_c, t, v) -> (n, out_c, t, v).  Eval-mode TCN forward."""
    w_conv = params['w_conv']                # (co, ci, 3, 1) PyTorch Conv2d layout
    bn_s = params['bn_s'].astype(jnp.float32)   # (1, co) folded BN scale
    bn_b = params['bn_b'].astype(jnp.float32)   # (1, co) folded BN bias
    n, ci, t, v = x_nchw.shape
    co = w_conv.shape[0]

    # NCHW -> channels-last rows, with the 3 temporal taps pre-stacked channel-wise
    # (zero-padded at the t edges per batch element). Dropout = identity in eval.
    x_cl = jnp.transpose(x_nchw, (0, 2, 3, 1)).astype(jnp.float32)      # (n, t, v, ci)
    zpad = jnp.zeros_like(x_cl[:, :1])
    x_stk = jnp.concatenate(
        [jnp.concatenate([zpad, x_cl[:, :-1]], axis=1),                 # x_{t-1} (tap 0)
         x_cl,                                                          # x_t     (tap 1)
         jnp.concatenate([x_cl[:, 1:], zpad], axis=1)],                 # x_{t+1} (tap 2)
        axis=-1).reshape(n * t * v, 3 * ci)

    # (co, ci, 3) -> (3, ci, co) -> (3*ci, co): row k*ci + i holds w[o, i, k], matching
    # the tap-major column order of x_stk, so the conv is one matmul.
    w_mat = jnp.transpose(w_conv[..., 0], (2, 1, 0)).reshape(3 * ci, co)
    w_mat = w_mat.astype(jnp.float32)

    rows = n * t * v
    g, rb = _pick_row_grid(rows)

    def full_spec(a):
        nd = a.ndim
        return pl.BlockSpec(a.shape, lambda i, _nd=nd: (0,) * _nd)

    out = pl.pallas_call(
        _tcn_kernel,
        out_shape=jax.ShapeDtypeStruct((rows, co), jnp.float32),
        grid=(g,),
        in_specs=[pl.BlockSpec((rb, 3 * ci), lambda i: (i, 0)),
                  full_spec(w_mat), full_spec(bn_s), full_spec(bn_b)],
        out_specs=pl.BlockSpec((rb, co), lambda i: (i, 0)),
        compiler_params=pltpu.CompilerParams(dimension_semantics=("parallel",)),
    )(x_stk, w_mat, bn_s, bn_b)

    return jnp.transpose(out.reshape(n, t, v, co), (0, 3, 1, 2))        # back to NCHW


# ----------------------------- pure-JAX reference -----------------------------
def tcn_reference(x_nchw, params):
    w = params['w_conv'][..., 0]                       # (co, ci, 3)
    n, ci, t, v = x_nchw.shape
    co = w.shape[0]
    x = x_nchw.astype(jnp.float32)
    xp = jnp.pad(x, ((0, 0), (0, 0), (1, 1), (0, 0)))  # pad t by 1 on each side
    y = (jnp.einsum('nitv,oi->notv', xp[:, :, :-2], w[:, :, 0])
         + jnp.einsum('nitv,oi->notv', xp[:, :, 1:-1], w[:, :, 1])
         + jnp.einsum('nitv,oi->notv', xp[:, :, 2:], w[:, :, 2]))
    y = y * jnp.tanh(jnp.maximum(y, 0.0) + jnp.log(1.0 + jnp.exp(-jnp.abs(y))))
    s = params['bn_s'].reshape(1, co, 1, 1)
    b = params['bn_b'].reshape(1, co, 1, 1)
    return y * s + b


# ----------------------------- deterministic params -----------------------------
def make_params(key, in_c, out_c, eps=1e-5):
    kw, kg, kb, km, kv = jax.random.split(key, 5)
    w_conv = 0.2 * jax.random.normal(kw, (out_c, in_c, 3, 1), jnp.float32)
    gamma = 1.0 + 0.1 * jax.random.normal(kg, (out_c,), jnp.float32)
    beta = 0.1 * jax.random.normal(kb, (out_c,), jnp.float32)
    mean = 0.1 * jax.random.normal(km, (out_c,), jnp.float32)
    var = 1.0 + 0.1 * jnp.abs(jax.random.normal(kv, (out_c,), jnp.float32))
    scale = gamma / jnp.sqrt(var + eps)                # eval-mode BN folded
    bias = beta - mean * scale
    return {'w_conv': w_conv,
            'bn_s': scale.reshape(1, out_c),
            'bn_b': bias.reshape(1, out_c)}


if __name__ == "__main__":
    # x: [n, in_c, t, v] as in the module docstring.
    n, in_c, out_c, t, v = 2, 4, 16, 8, 16

    key = jax.random.PRNGKey(0)
    kx, kp = jax.random.split(key)
    x = jax.random.normal(kx, (n, in_c, t, v), jnp.float32)
    params = make_params(kp, in_c, out_c)

    out = jax.block_until_ready(tcn_forward(x, params))

    ref = tcn_reference(x, params)
    assert out.shape == (n, out_c, t, v), out.shape
    max_err = float(jnp.max(jnp.abs(out - ref)))
    assert max_err < 1e-3, f"mismatch vs reference: {max_err}"
    # TODO(synk): nn.Dropout train-mode RNG masking is not modeled (eval => identity).
    print("KERNEL_OK")
</pallas_src>

<mosaic_0001>
module attributes {stable_mosaic.version = 11 : i64} {
  func.func @_tcn_kernel(%arg0: i32, %arg1: memref<128x12xf32, #tpu.memory_space<vmem>>, %arg2: memref<12x16xf32, #tpu.memory_space<vmem>>, %arg3: memref<1x16xf32, #tpu.memory_space<vmem>>, %arg4: memref<1x16xf32, #tpu.memory_space<vmem>>, %arg5: memref<128x16xf32, #tpu.memory_space<vmem>>) attributes {dimension_semantics = [#tpu.dimension_semantics<parallel>], iteration_bounds = array<i64: 2>, scalar_prefetch = 0 : i64, scratch_operands = 0 : i64, tpu.core_type = #tpu.core_type<tc>, window_params = [{transform_indices = @transform_0, window_bounds = array<i64: 128, 12>}, {pipeline_mode = #tpu.pipeline_mode<synchronous>, transform_indices = @transform_1, window_bounds = array<i64: 12, 16>}, {pipeline_mode = #tpu.pipeline_mode<synchronous>, transform_indices = @transform_2, window_bounds = array<i64: 1, 16>}, {pipeline_mode = #tpu.pipeline_mode<synchronous>, transform_indices = @transform_3, window_bounds = array<i64: 1, 16>}, {transform_indices = @transform_4, window_bounds = array<i64: 128, 16>}]} {
    %c0 = arith.constant 0 : index
    %c0_0 = arith.constant 0 : index
    %0 = vector.load %arg1[%c0, %c0_0] : memref<128x12xf32, #tpu.memory_space<vmem>>, vector<128x12xf32>
    %c0_1 = arith.constant 0 : index
    %c0_2 = arith.constant 0 : index
    %1 = vector.load %arg2[%c0_1, %c0_2] : memref<12x16xf32, #tpu.memory_space<vmem>>, vector<12x16xf32>
    %cst = arith.constant dense<0.000000e+00> : vector<128x16xf32>
    %2 = tpu.matmul %0, %1, %cst {dimension_numbers = #tpu.dot_dimension_numbers<[1], [0], [0], [1], [0, 0, 1, 1], [], []>} : vector<128x12xf32>, vector<12x16xf32>, vector<128x16xf32> -> vector<128x16xf32>
    %cst_3 = arith.constant 0.000000e+00 : f32
    %3 = vector.broadcast %cst_3 : f32 to vector<128x16xf32>
    %4 = arith.maximumf %2, %3 : vector<128x16xf32>
    %5 = math.absf %2 : vector<128x16xf32>
    %cst_4 = arith.constant 0.000000e+00 : f32
    %6 = vector.broadcast %cst_4 : f32 to vector<128x16xf32>
    %7 = arith.subf %6, %5 : vector<128x16xf32>
    %8 = math.exp %7 : vector<128x16xf32>
    %cst_5 = arith.constant 1.000000e+00 : f32
    %9 = vector.broadcast %cst_5 : f32 to vector<128x16xf32>
    %10 = arith.addf %9, %8 : vector<128x16xf32>
    %11 = math.log %10 : vector<128x16xf32>
    %12 = arith.addf %4, %11 : vector<128x16xf32>
    %13 = math.tanh %12 : vector<128x16xf32>
    %14 = arith.mulf %2, %13 : vector<128x16xf32>
    %c0_6 = arith.constant 0 : index
    %c0_7 = arith.constant 0 : index
    %15 = vector.load %arg3[%c0_6, %c0_7] : memref<1x16xf32, #tpu.memory_space<vmem>>, vector<1x16xf32>
    %16 = vector.broadcast %15 : vector<1x16xf32> to vector<128x16xf32>
    %17 = arith.mulf %14, %16 : vector<128x16xf32>
    %c0_8 = arith.constant 0 : index
    %c0_9 = arith.constant 0 : index
    %18 = vector.load %arg4[%c0_8, %c0_9] : memref<1x16xf32, #tpu.memory_space<vmem>>, vector<1x16xf32>
    %19 = vector.broadcast %18 : vector<1x16xf32> to vector<128x16xf32>
    %20 = arith.addf %17, %19 : vector<128x16xf32>
    %c0_10 = arith.constant 0 : index
    %c0_11 = arith.constant 0 : index
    %21 = vector.load %arg5[%c0_10, %c0_11] : memref<128x16xf32, #tpu.memory_space<vmem>>, vector<128x16xf32>
    tpu.vector_store %arg5[%c0_10, %c0_11], %20 {strides = array<i32>} : memref<128x16xf32, #tpu.memory_space<vmem>>, vector<128x16xf32>,
    return
  }
  func.func @transform_0(%arg0: i32) -> (i32, i32) {
    %c0_i32 = arith.constant 0 : i32
    %c0_i32_0 = arith.constant 0 : i32
    return %arg0, %c0_i32 : i32, i32
  }
  func.func @transform_1(%arg0: i32) -> (i32, i32) {
    %c0_i32 = arith.constant 0 : i32
    %c0_i32_0 = arith.constant 0 : i32
    %c0_i32_1 = arith.constant 0 : i32
    return %c0_i32, %c0_i32_0 : i32, i32
  }
  func.func @transform_2(%arg0: i32) -> (i32, i32) {
    %c0_i32 = arith.constant 0 : i32
    %c0_i32_0 = arith.constant 0 : i32
    %c0_i32_1 = arith.constant 0 : i32
    return %c0_i32, %c0_i32_0 : i32, i32
  }
  func.func @transform_3(%arg0: i32) -> (i32, i32) {
    %c0_i32 = arith.constant 0 : i32
    %c0_i32_0 = arith.constant 0 : i32
    %c0_i32_1 = arith.constant 0 : i32
    return %c0_i32, %c0_i32_0 : i32, i32
  }
  func.func @transform_4(%arg0: i32) -> (i32, i32) {
    %c0_i32 = arith.constant 0 : i32
    %c0_i32_0 = arith.constant 0 : i32
    return %arg0, %c0_i32 : i32, i32
  }
}

</mosaic_0001>

<llo_original>
// kernel: tpu_custom_call.1
$region0: #{tpu_custom_call.1}
  #allocation0 [shape = 'u32[]', space=smem, size = 0x4, offset = 0x4, fixed_abs, tag = 'smem constant byte address 0x4 - core index']
  #allocation1 [shape = 'u32[144,128]{1,0:T(1,128)}', space=vmem, size = 0x12000, scoped, tag = 'internal scratch']
  %s0 = inlined_call_operand.vmem [shape: f32[256,12], index: 0, kind: input, shape index: {}]
  %s1 = inlined_call_operand.vmem [shape: f32[12,16], index: 1, kind: input, shape index: {}]
  %s2 = inlined_call_operand.vmem [shape: f32[1,16], index: 2, kind: input, shape index: {}]
  %s3 = inlined_call_operand.vmem [shape: f32[1,16], index: 3, kind: input, shape index: {}]
  %s4 = inlined_call_operand.vmem [shape: f32[256,16], index: 4, kind: output, shape index: {}]
  %s5 = sld [smem:[#allocation0]]
  $region49: #{tpu_custom_call.1} parent=0
    _
  %s7 = ssub.s32 1, %s5
  %s8 = scalar_select 0, %s7, %s5
  loop: start=0, step=1, limit=4
  $region2: #{tpu_custom_call.1} parent=0 // loop_pre_header
    _
  $region3: #{tpu_custom_call.1} parent=0 // loop_header
    %s10 = sphi 0, %s14
    %p11 = scmp.ge.s32.totalorder %s10, 4
    %s20 = sphi 0, %s22
    %s23 = sphi 0, %s20
    %s24 = sphi 0, %s23
    %s40 = sphi 0, %s24
    %s44 = sphi 0, %s44
    %s46 = sphi 0, %s44
    %s47 = sphi 0, %s46
    %s61 = sphi 0, %s47
    %s65 = sphi 0, %s65
    %s67 = sphi 0, %s65
    %s68 = sphi 0, %s67
    %s82 = sphi 0, %s68
    %s86 = sphi 0, %s86
    %s88 = sphi 0, %s86
    %s89 = sphi 0, %s88
    %s103 = sphi 0, %s89
    %s109 = sphi 0, %s111
    %s112 = sphi 0, %s109
    %s113 = sphi 0, %s112
    %s129 = sphi 0, %s113
  $region4: #{tpu_custom_call.1} parent=0 // loop_header_branch
    %13 = sbr.rel (%p11) target = $region8
  $region5: #{tpu_custom_call.1} parent=0 // loop_body
    %s15 = ssub.s32 %s10, 1
    %s16 = ssub.s32 %s10, 2
    %s17 = sadd.s32 %s10, 1
    %s18 = ssub.s32 %s10, %s17
    %p19 = scmp.eq.s32.totalorder %s18, 0
    %s21 = sadd.s32 %s20, 1
    %s22 = scalar_select %p19, %s20, %s21
    %p25 = pneg %p19
    %p26 = scmp.eq.s32.totalorder %s10, 1
    %p27 = por %p25, %p26
    %p28 = scmp.ne.s32.totalorder %s20, %s23
    %p29 = scmp.eq.s32.totalorder %s10, 0
    %p30 = por %p28, %p29
    %p31 = scmp.ne.s32.totalorder %s20, %s23
    %p32 = scmp.eq.s32.totalorder %s15, 1
    %p33 = por %p31, %p32
    %p34 = scmp.ne.s32.totalorder %s23, %s24
    %p35 = scmp.eq.s32.totalorder %s15, 0
    %p36 = por %p34, %p35
    %p37 = scmp.ne.s32.totalorder %s23, %s24
    %p38 = scmp.eq.s32.totalorder %s16, 1
    %p39 = por %p37, %p38
    %p41 = scmp.ne.s32.totalorder %s24, %s40
    %p42 = scmp.eq.s32.totalorder %s16, 0
    %p43 = por %p41, %p42
    %s45 = sadd.s32 %s44, 1
    %p48 = scmp.eq.s32.totalorder %s10, 1
    %p49 = scmp.ne.s32.totalorder %s44, %s46
    %p50 = scmp.eq.s32.totalorder %s10, 0
    %p51 = por %p49, %p50
    %p52 = scmp.ne.s32.totalorder %s44, %s46
    %p53 = scmp.eq.s32.totalorder %s15, 1
    %p54 = por %p52, %p53
    %p55 = scmp.ne.s32.totalorder %s46, %s47
    %p56 = scmp.eq.s32.totalorder %s15, 0
    %p57 = por %p55, %p56
    %p58 = scmp.ne.s32.totalorder %s46, %s47
    %p59 = scmp.eq.s32.totalorder %s16, 1
    %p60 = por %p58, %p59
    %p62 = scmp.ne.s32.totalorder %s47, %s61
    %p63 = scmp.eq.s32.totalorder %s16, 0
    %p64 = por %p62, %p63
    %s66 = sadd.s32 %s65, 1
    %p69 = scmp.eq.s32.totalorder %s10, 1
    %p70 = scmp.ne.s32.totalorder %s65, %s67
    %p71 = scmp.eq.s32.totalorder %s10, 0
    %p72 = por %p70, %p71
    %p73 = scmp.ne.s32.totalorder %s65, %s67
    %p74 = scmp.eq.s32.totalorder %s15, 1
    %p75 = por %p73, %p74
    %p76 = scmp.ne.s32.totalorder %s67, %s68
    %p77 = scmp.eq.s32.totalorder %s15, 0
    %p78 = por %p76, %p77
    %p79 = scmp.ne.s32.totalorder %s67, %s68
    %p80 = scmp.eq.s32.totalorder %s16, 1
    %p81 = por %p79, %p80
    %p83 = scmp.ne.s32.totalorder %s68, %s82
    %p84 = scmp.eq.s32.totalorder %s16, 0
    %p85 = por %p83, %p84
    %s87 = sadd.s32 %s86, 1
    %p90 = scmp.eq.s32.totalorder %s10, 1
    %p91 = scmp.ne.s32.totalorder %s86, %s88
    %p92 = scmp.eq.s32.totalorder %s10, 0
    %p93 = por %p91, %p92
    %p94 = scmp.ne.s32.totalorder %s86, %s88
    %p95 = scmp.eq.s32.totalorder %s15, 1
    %p96 = por %p94, %p95
    %p97 = scmp.ne.s32.totalorder %s88, %s89
    %p98 = scmp.eq.s32.totalorder %s15, 0
    %p99 = por %p97, %p98
    %p100 = scmp.ne.s32.totalorder %s88, %s89
    %p101 = scmp.eq.s32.totalorder %s16, 1
    %p102 = por %p100, %p101
    %p104 = scmp.ne.s32.totalorder %s89, %s103
    %p105 = scmp.eq.s32.totalorder %s16, 0
    %p106 = por %p104, %p105
    %s107 = ssub.s32 %s10, %s17
    %p108 = scmp.eq.s32.totalorder %s107, 0
    %s110 = sadd.s32 %s109, 1
    %s111 = scalar_select %p108, %s109, %s110
    %p114 = pneg %p108
    %p115 = scmp.eq.s32.totalorder %s10, 1
    %p116 = por %p114, %p115
    %p117 = scmp.ne.s32.totalorder %s109, %s112
    %p118 = scmp.eq.s32.totalorder %s10, 0
    %p119 = por %p117, %p118
    %p120 = scmp.ne.s32.totalorder %s109, %s112
    %p121 = scmp.eq.s32.totalorder %s15, 1
    %p122 = por %p120, %p121
    %p123 = scmp.ne.s32.totalorder %s112, %s113
    %p124 = scmp.eq.s32.totalorder %s15, 0
    %p125 = por %p123, %p124
    %p126 = scmp.ne.s32.totalorder %s112, %s113
    %p127 = scmp.eq.s32.totalorder %s16, 1
    %p128 = por %p126, %p127
    %p130 = scmp.ne.s32.totalorder %s113, %s129
    %p131 = scmp.eq.s32.totalorder %s16, 0
    %p132 = por %p130, %p131
    %p133 = scmp.le.s32.totalorder 1, %s10
    %p134 = scmp.lt.s32.totalorder %s10, 3
    %p135 = pnand %p133, %p134
    %p136 = pneg %p135
    // Predicated region
    $region9: #{tpu_custom_call.1} parent=5 // pred_check
      _
    $region10: #{tpu_custom_call.1} parent=5 // pred_check_branch
      %138 = sbr.rel (%p135) target = $region12
    $region11: #{tpu_custom_call.1} parent=5 // pred_region
      %s139 = ssub.s32 %s10, 1
      // Predicated region
      $region13: #{tpu_custom_call.1} parent=11 // pred_check
        %p140 = pneg %p57
      $region14: #{tpu_custom_call.1} parent=11 // pred_check_branch
        %142 = sbr.rel (%p140) target = $region16
      $region15: #{tpu_custom_call.1} parent=11 // pred_region
        _
      $region16: #{tpu_custom_call.1} parent=11 // pred_fallthru
        _
      // Predicated region
      $region17: #{tpu_custom_call.1} parent=11 // pred_check
        %p143 = pneg %p78
      $region18: #{tpu_custom_call.1} parent=11 // pred_check_branch
        %145 = sbr.rel (%p143) target = $region20
      $region19: #{tpu_custom_call.1} parent=11 // pred_region
        _
      $region20: #{tpu_custom_call.1} parent=11 // pred_fallthru
        _
      // Predicated region
      $region21: #{tpu_custom_call.1} parent=11 // pred_check
        %p146 = pneg %p99
      $region22: #{tpu_custom_call.1} parent=11 // pred_check_branch
        %148 = sbr.rel (%p146) target = $region24
      $region23: #{tpu_custom_call.1} parent=11 // pred_region
        _
      $region24: #{tpu_custom_call.1} parent=11 // pred_fallthru
        _
    $region12: #{tpu_custom_call.1} parent=5 // pred_fallthru
      _
    %p149 = scmp.lt.s32.totalorder %s10, 2
    // Predicated region
    $region25: #{tpu_custom_call.1} parent=5 // pred_check
      %p150 = pneg %p149
    $region26: #{tpu_custom_call.1} parent=5 // pred_check_branch
      %152 = sbr.rel (%p150) target = $region28
    $region27: #{tpu_custom_call.1} parent=5 // pred_region
      // Predicated region
      $region29: #{tpu_custom_call.1} parent=27 // pred_check
        %p153 = pneg %p30
      $region30: #{tpu_custom_call.1} parent=27 // pred_check_branch
        %155 = sbr.rel (%p153) target = $region32
      $region31: #{tpu_custom_call.1} parent=27 // pred_region
        %s156 = smul.u32 16, %s10
        %p157 = scmp.lt.s32.totalorder %s156, 31
        %s158 = scalar_select %p157, %s156, 31
        %s159 = smul.addr %s158, 8
        %s160 = scalar_lea.vmem %s0, %s159
        %s161 = smul.u32 16, %s10
      $region32: #{tpu_custom_call.1} parent=27 // pred_fallthru
        _
    $region28: #{tpu_custom_call.1} parent=5 // pred_fallthru
      _
    %p162 = scmp.le.s32.totalorder 1, %s10
    %p163 = scmp.lt.s32.totalorder %s10, 3
    %p164 = pnand %p162, %p163
    %p165 = pneg %p164
    // Predicated region
    $region33: #{tpu_custom_call.1} parent=5 // pred_check
      _
    $region34: #{tpu_custom_call.1} parent=5 // pred_check_branch
      %167 = sbr.rel (%p164) target = $region36
    $region35: #{tpu_custom_call.1} parent=5 // pred_region
      %s168 = ssub.s32 %s10, 1
      %s169 = smul.u32 16, %s15
      %p170 = scmp.lt.s32.totalorder %s169, 31
      %s171 = scalar_select %p170, %s169, 31
      %s172 = smul.addr %s171, 8
      %s173 = scalar_lea.vmem %s0, %s172
      %p174 = pneg %p36
      %p175 = pneg %p33
      %p176 = pneg %p57
      %p177 = pneg %p54
      %p178 = pneg %p78
      %p179 = pneg %p75
      %p180 = pneg %p99
      %p181 = pneg %p96
      %p182 = pneg %p125
      %p183 = pneg %p122
      %s184 = smul.u32 16, %s15
      %p185 = scmp.lt.s32.totalorder %s184, 31
      %s186 = scalar_select %p185, %s184, 31
      %s187 = smul.addr %s186, 8
      %s188 = scalar_lea.vmem %s4, %s187
      %s189 = smul.u32 16, %s15
      %p190 = scmp.lt.s32.totalorder %s189, 31
      %s191 = scalar_select %p190, %s189, 31
      %s192 = smul.addr %s191, 8
      %s193 = scalar_lea.vmem %s0, %s192
      %s194 = smul.u32 16, %s15
      %s195 = smul.u32 16, %s15
      %p196 = scmp.lt.s32.totalorder %s195, 31
      %s197 = scalar_select %p196, %s195, 31
      %s198 = smul.addr %s197, 8
      %s199 = scalar_lea.vmem %s4, %s198
      %s200 = smul.u32 16, %s15
      %v201 = vld [vmem:[%s193] sm:$0xff]
      %v202 = vld [vmem:[%s193 + $0x8] sm:$0xff]
      %v203 = vld [vmem:[%s193 + $0x10] sm:$0xff]
      %v204 = vld [vmem:[%s193 + $0x18] sm:$0xff]
      %v205 = vld [vmem:[%s193 + $0x20] sm:$0xff]
      %v206 = vld [vmem:[%s193 + $0x28] sm:$0xff]
      %v207 = vld [vmem:[%s193 + $0x30] sm:$0xff]
      %v208 = vld [vmem:[%s193 + $0x38] sm:$0xff]
      %v209 = vld [vmem:[%s193 + $0x40] sm:$0xff]
      %v210 = vld [vmem:[%s193 + $0x48] sm:$0xff]
      %v211 = vld [vmem:[%s193 + $0x50] sm:$0xff]
      %v212 = vld [vmem:[%s193 + $0x58] sm:$0xff]
      %v213 = vld [vmem:[%s193 + $0x60] sm:$0xff]
      %v214 = vld [vmem:[%s193 + $0x68] sm:$0xff]
      %v215 = vld [vmem:[%s193 + $0x70] sm:$0xff]
      %v216 = vld [vmem:[%s193 + $0x78] sm:$0xff]
      %v217 = vld [vmem:[%s1] sm:$0xff]
      %v218 = vld [vmem:[%s1 + $0x8] sm:$0xf]
      %vm219 = vcmask 97280
      %v221 = vsel %vm219, %v201, 0
      %v224 = vsel %vm219, %v202, 0
      %v227 = vsel %vm219, %v203, 0
      %v230 = vsel %vm219, %v204, 0
      %v233 = vsel %vm219, %v205, 0
      %v236 = vsel %vm219, %v206, 0
      %v239 = vsel %vm219, %v207, 0
      %v242 = vsel %vm219, %v208, 0
      %v245 = vsel %vm219, %v209, 0
      %v248 = vsel %vm219, %v210, 0
      %v251 = vsel %vm219, %v211, 0
      %v254 = vsel %vm219, %v212, 0
      %v257 = vsel %vm219, %v213, 0
      %v260 = vsel %vm219, %v214, 0
      %v263 = vsel %vm219, %v215, 0
      %v266 = vsel %vm219, %v216, 0
      %vm268 = vcmask 1043456
      %v270 = vsel %vm268, %v218, 0
      %272 = vmatprep.subr.mxu0 0.0
      %273 = vmatpush1.msra.mxu0 %v217
      %274 = vmatprep.subr.mxu0 0.0
      %275 = vmatpush1.msra.mxu0 %v270
      %276 = vmatprep.subr.mxu0 0.0
      %277 = vmatpush1.msra.mxu0 0.0
      %278 = vmatprep.subr.mxu0 0.0
      %279 = vmatpush1.msra.mxu0 0.0
      %280 = vmatprep.subr.mxu0 0.0
      %281 = vmatpush1.msra.mxu0 0.0
      %282 = vmatprep.subr.mxu0 0.0
      %283 = vmatpush1.msra.mxu0 0.0
      %284 = vmatprep.subr.mxu0 0.0
      %285 = vmatpush1.msra.mxu0 0.0
      %286 = vmatprep.subr.mxu0 0.0
      %287 = vmatpush1.msra.mxu0 0.0
      %288 = vmatprep.subr.mxu0 0.0
      %289 = vmatpush1.msra.mxu0 0.0
      %290 = vmatprep.subr.mxu0 0.0
      %291 = vmatpush1.msra.mxu0 0.0
      %292 = vmatprep.subr.mxu0 0.0
      %293 = vmatpush1.msra.mxu0 0.0
      %294 = vmatprep.subr.mxu0 0.0
      %295 = vmatpush1.msra.mxu0 0.0
      %296 = vmatprep.subr.mxu0 0.0
      %297 = vmatpush1.msra.mxu0 0.0
      %298 = vmatprep.subr.mxu0 0.0
      %299 = vmatpush1.msra.mxu0 0.0
      %300 = vmatprep.subr.mxu0 0.0
      %301 = vmatpush1.msra.mxu0 0.0
      %302 = vmatprep.subr.mxu0 0.0
      %303 = vmatpush1.msra.mxu0 0.0
      %304 = vmatprep.subr.mxu0 0.0
      %305 = vmatpush1.msra.mxu0 0.0
      %306 = vmatprep.subr.mxu0 0.0
      %307 = vmatpush1.msra.mxu0 0.0
      %308 = vmatprep.subr.mxu0 0.0
      %309 = vmatpush1.msra.mxu0 0.0
      %310 = vmatprep.subr.mxu0 0.0
      %311 = vmatpush1.msra.mxu0 0.0
      %312 = vmatprep.subr.mxu0 0.0
      %313 = vmatpush1.msra.mxu0 0.0
      %314 = vmatprep.subr.mxu0 0.0
      %315 = vmatpush1.msra.mxu0 0.0
      %316 = vmatprep.subr.mxu0 0.0
      %317 = vmatpush1.msra.mxu0 0.0
      %318 = vmatprep.subr.mxu0 0.0
      %319 = vmatpush1.msra.mxu0 0.0
      %320 = vmatprep.subr.mxu0 0.0
      %321 = vmatpush1.msra.mxu0 0.0
      %322 = vmatprep.subr.mxu0 0.0
      %323 = vmatpush1.msra.mxu0 0.0
      %324 = vmatprep.subr.mxu0 0.0
      %325 = vmatpush1.msra.mxu0 0.0
      %326 = vmatprep.subr.mxu0 0.0
      %327 = vmatpush1.msra.mxu0 0.0
      %328 = vmatprep.subr.mxu0 0.0
      %329 = vmatpush1.msra.mxu0 0.0
      %330 = vmatprep.subr.mxu0 0.0
      %331 = vmatpush1.msra.mxu0 0.0
      %332 = vmatprep.subr.mxu0 0.0
      %333 = vmatpush1.msra.mxu0 0.0
      %334 = vmatprep.subr.mxu0 0.0
      %335 = vmatpush1.msra.mxu0 0.0
      %336 = vmatprep.mubr.f32.mxu0 0.0
      %337 = vmatmul.mubr.f32.gmra.mrb[0].mxu0 %v221
      %v338 = vpop.f32.mrb[0].mxu0
      %v339 = vadd.f32 0.0, %v338
      %v340 = vpop.f32.mrb[0].mxu0
      %341 = vmatprep.mubr.f32.mxu0 0.0
      %342 = vmatmul.mubr.f32.gmra.mrb[0].mxu0 %v224
      %v343 = vpop.f32.mrb[0].mxu0
      %v344 = vadd.f32 0.0, %v343
      %v345 = vpop.f32.mrb[0].mxu0
      %346 = vmatprep.mubr.f32.mxu0 0.0
      %347 = vmatmul.mubr.f32.gmra.mrb[0].mxu0 %v227
      %v348 = vpop.f32.mrb[0].mxu0
      %v349 = vadd.f32 0.0, %v348
      %v350 = vpop.f32.mrb[0].mxu0
      %351 = vmatprep.mubr.f32.mxu0 0.0
      %352 = vmatmul.mubr.f32.gmra.mrb[0].mxu0 %v230
      %v353 = vpop.f32.mrb[0].mxu0
      %v354 = vadd.f32 0.0, %v353
      %v355 = vpop.f32.mrb[0].mxu0
      %356 = vmatprep.mubr.f32.mxu0 0.0
      %357 = vmatmul.mubr.f32.gmra.mrb[0].mxu0 %v233
      %v358 = vpop.f32.mrb[0].mxu0
      %v359 = vadd.f32 0.0, %v358
      %v360 = vpop.f32.mrb[0].mxu0
      %361 = vmatprep.mubr.f32.mxu0 0.0
      %362 = vmatmul.mubr.f32.gmra.mrb[0].mxu0 %v236
      %v363 = vpop.f32.mrb[0].mxu0
      %v364 = vadd.f32 0.0, %v363
      %v365 = vpop.f32.mrb[0].mxu0
      %366 = vmatprep.mubr.f32.mxu0 0.0
      %367 = vmatmul.mubr.f32.gmra.mrb[0].mxu0 %v239
      %v368 = vpop.f32.mrb[0].mxu0
      %v369 = vadd.f32 0.0, %v368
      %v370 = vpop.f32.mrb[0].mxu0
      %371 = vmatprep.mubr.f32.mxu0 0.0
      %372 = vmatmul.mubr.f32.gmra.mrb[0].mxu0 %v242
      %v373 = vpop.f32.mrb[0].mxu0
      %v374 = vadd.f32 0.0, %v373
      %v375 = vpop.f32.mrb[0].mxu0
      %376 = vmatprep.mubr.f32.mxu0 0.0
      %377 = vmatmul.mubr.f32.gmra.mrb[0].mxu0 %v245
      %v378 = vpop.f32.mrb[0].mxu0
      %v379 = vadd.f32 0.0, %v378
      %v380 = vpop.f32.mrb[0].mxu0
      %381 = vmatprep.mubr.f32.mxu0 0.0
      %382 = vmatmul.mubr.f32.gmra.mrb[0].mxu0 %v248
      %v383 = vpop.f32.mrb[0].mxu0
      %v384 = vadd.f32 0.0, %v383
      %v385 = vpop.f32.mrb[0].mxu0
      %386 = vmatprep.mubr.f32.mxu0 0.0
      %387 = vmatmul.mubr.f32.gmra.mrb[0].mxu0 %v251
      %v388 = vpop.f32.mrb[0].mxu0
      %v389 = vadd.f32 0.0, %v388
      %v390 = vpop.f32.mrb[0].mxu0
      %391 = vmatprep.mubr.f32.mxu0 0.0
      %392 = vmatmul.mubr.f32.gmra.mrb[0].mxu0 %v254
      %v393 = vpop.f32.mrb[0].mxu0
      %v394 = vadd.f32 0.0, %v393
      %v395 = vpop.f32.mrb[0].mxu0
      %396 = vmatprep.mubr.f32.mxu0 0.0
      %397 = vmatmul.mubr.f32.gmra.mrb[0].mxu0 %v257
      %v398 = vpop.f32.mrb[0].mxu0
      %v399 = vadd.f32 0.0, %v398
      %v400 = vpop.f32.mrb[0].mxu0
      %401 = vmatprep.mubr.f32.mxu0 0.0
      %402 = vmatmul.mubr.f32.gmra.mrb[0].mxu0 %v260
      %v403 = vpop.f32.mrb[0].mxu0
      %v404 = vadd.f32 0.0, %v403
      %v405 = vpop.f32.mrb[0].mxu0
      %406 = vmatprep.mubr.f32.mxu0 0.0
      %407 = vmatmul.mubr.f32.gmra.mrb[0].mxu0 %v263
      %v408 = vpop.f32.mrb[0].mxu0
      %v409 = vadd.f32 0.0, %v408
      %v410 = vpop.f32.mrb[0].mxu0
      %411 = vmatprep.mubr.f32.mxu0 0.0
      %412 = vmatmul.mubr.f32.gmra.mrb[0].mxu0 %v266
      %v413 = vpop.f32.mrb[0].mxu0
      %v414 = vadd.f32 0.0, %v413
      %v415 = vpop.f32.mrb[0].mxu0
      %416 = vdwg.mxu0
      %v417 = vmax.f32 %v339, 0.0
      %v418 = vmax.f32 %v344, 0.0
      %v419 = vmax.f32 %v349, 0.0
      %v420 = vmax.f32 %v354, 0.0
      %v421 = vmax.f32 %v359, 0.0
      %v422 = vmax.f32 %v364, 0.0
      %v423 = vmax.f32 %v369, 0.0
      %v424 = vmax.f32 %v374, 0.0
      %v425 = vmax.f32 %v379, 0.0
      %v426 = vmax.f32 %v384, 0.0
      %v427 = vmax.f32 %v389, 0.0
      %v428 = vmax.f32 %v394, 0.0
      %v429 = vmax.f32 %v399, 0.0
      %v430 = vmax.f32 %v404, 0.0
      %v431 = vmax.f32 %v409, 0.0
      %v432 = vmax.f32 %v414, 0.0
      %v433 = vand.u32 2147483647, %v339
      %v434 = vand.u32 2147483647, %v344
      %v435 = vand.u32 2147483647, %v349
      %v436 = vand.u32 2147483647, %v354
      %v437 = vand.u32 2147483647, %v359
      %v438 = vand.u32 2147483647, %v364
      %v439 = vand.u32 2147483647, %v369
      %v440 = vand.u32 2147483647, %v374
      %v441 = vand.u32 2147483647, %v379
      %v442 = vand.u32 2147483647, %v384
      %v443 = vand.u32 2147483647, %v389
      %v444 = vand.u32 2147483647, %v394
      %v445 = vand.u32 2147483647, %v399
      %v446 = vand.u32 2147483647, %v404
      %v447 = vand.u32 2147483647, %v409
      %v448 = vand.u32 2147483647, %v414
      %v449 = vsub.f32 0.0, %v433
      %v450 = vsub.f32 0.0, %v434
      %v451 = vsub.f32 0.0, %v435
      %v452 = vsub.f32 0.0, %v436
      %v453 = vsub.f32 0.0, %v437
      %v454 = vsub.f32 0.0, %v438
      %v455 = vsub.f32 0.0, %v439
      %v456 = vsub.f32 0.0, %v440
      %v457 = vsub.f32 0.0, %v441
      %v458 = vsub.f32 0.0, %v442
      %v459 = vsub.f32 0.0, %v443
      %v460 = vsub.f32 0.0, %v444
      %v461 = vsub.f32 0.0, %v445
      %v462 = vsub.f32 0.0, %v446
      %v463 = vsub.f32 0.0, %v447
      %v464 = vsub.f32 0.0, %v448
      %v465 = vmul.f32 %v449, 1.442695
      %v466 = vpow.pop %v465
      %v467 = vmul.f32 %v450, 1.442695
      %v468 = vpow.pop %v467
      %v469 = vmul.f32 %v451, 1.442695
      %v470 = vpow.pop %v469
      %v471 = vmul.f32 %v452, 1.442695
      %v472 = vpow.pop %v471
      %v473 = vmul.f32 %v453, 1.442695
      %v474 = vpow.pop %v473
      %v475 = vmul.f32 %v454, 1.442695
      %v476 = vpow.pop %v475
      %v477 = vmul.f32 %v455, 1.442695
      %v478 = vpow.pop %v477
      %v479 = vmul.f32 %v456, 1.442695
      %v480 = vpow.pop %v479
      %v481 = vmul.f32 %v457, 1.442695
      %v482 = vpow.pop %v481
      %v483 = vmul.f32 %v458, 1.442695
      %v484 = vpow.pop %v483
      %v485 = vmul.f32 %v459, 1.442695
      %v486 = vpow.pop %v485
      %v487 = vmul.f32 %v460, 1.442695
      %v488 = vpow.pop %v487
      %v489 = vmul.f32 %v461, 1.442695
      %v490 = vpow.pop %v489
      %v491 = vmul.f32 %v462, 1.442695
      %v492 = vpow.pop %v491
      %v493 = vmul.f32 %v463, 1.442695
      %v494 = vpow.pop %v493
      %v495 = vmul.f32 %v464, 1.442695
      %v496 = vpow.pop %v495
      %v497 = vadd.f32 %v466, 1.0
      %v498 = vadd.f32 %v468, 1.0
      %v499 = vadd.f32 %v470, 1.0
      %v500 = vadd.f32 %v472, 1.0
      %v501 = vadd.f32 %v474, 1.0
      %v502 = vadd.f32 %v476, 1.0
      %v503 = vadd.f32 %v478, 1.0
      %v504 = vadd.f32 %v480, 1.0
      %v505 = vadd.f32 %v482, 1.0
      %v506 = vadd.f32 %v484, 1.0
      %v507 = vadd.f32 %v486, 1.0
      %v508 = vadd.f32 %v488, 1.0
      %v509 = vadd.f32 %v490, 1.0
      %v510 = vadd.f32 %v492, 1.0
      %v511 = vadd.f32 %v494, 1.0
      %v512 = vadd.f32 %v496, 1.0
      %v513 = vlog2.pop %v497
      %v514 = vmul.f32 %v513, 0.6931472
      %v515 = vlog2.pop %v498
      %v516 = vmul.f32 %v515, 0.6931472
      %v517 = vlog2.pop %v499
      %v518 = vmul.f32 %v517, 0.6931472
      %v519 = vlog2.pop %v500
      %v520 = vmul.f32 %v519, 0.6931472
      %v521 = vlog2.pop %v501
      %v522 = vmul.f32 %v521, 0.6931472
      %v523 = vlog2.pop %v502
      %v524 = vmul.f32 %v523, 0.6931472
      %v525 = vlog2.pop %v503
      %v526 = vmul.f32 %v525, 0.6931472
      %v527 = vlog2.pop %v504
      %v528 = vmul.f32 %v527, 0.6931472
      %v529 = vlog2.pop %v505
      %v530 = vmul.f32 %v529, 0.6931472
      %v531 = vlog2.pop %v506
      %v532 = vmul.f32 %v531, 0.6931472
      %v533 = vlog2.pop %v507
      %v534 = vmul.f32 %v533, 0.6931472
      %v535 = vlog2.pop %v508
      %v536 = vmul.f32 %v535, 0.6931472
      %v537 = vlog2.pop %v509
      %v538 = vmul.f32 %v537, 0.6931472
      %v539 = vlog2.pop %v510
      %v540 = vmul.f32 %v539, 0.6931472
      %v541 = vlog2.pop %v511
      %v542 = vmul.f32 %v541, 0.6931472
      %v543 = vlog2.pop %v512
      %v544 = vmul.f32 %v543, 0.6931472
      %v545 = vadd.f32 %v417, %v514
      %v546 = vadd.f32 %v418, %v516
      %v547 = vadd.f32 %v419, %v518
      %v548 = vadd.f32 %v420, %v520
      %v549 = vadd.f32 %v421, %v522
      %v550 = vadd.f32 %v422, %v524
      %v551 = vadd.f32 %v423, %v526
      %v552 = vadd.f32 %v424, %v528
      %v553 = vadd.f32 %v425, %v530
      %v554 = vadd.f32 %v426, %v532
      %v555 = vadd.f32 %v427, %v534
      %v556 = vadd.f32 %v428, %v536
      %v557 = vadd.f32 %v429, %v538
      %v558 = vadd.f32 %v430, %v540
      %v559 = vadd.f32 %v431, %v542
      %v560 = vadd.f32 %v432, %v544
      %v561 = vtanh.pop %v545
      %v562 = vtanh.pop %v546
      %v563 = vtanh.pop %v547
      %v564 = vtanh.pop %v548
      %v565 = vtanh.pop %v549
      %v566 = vtanh.pop %v550
      %v567 = vtanh.pop %v551
      %v568 = vtanh.pop %v552
      %v569 = vtanh.pop %v553
      %v570 = vtanh.pop %v554
      %v571 = vtanh.pop %v555
      %v572 = vtanh.pop %v556
      %v573 = vtanh.pop %v557
      %v574 = vtanh.pop %v558
      %v575 = vtanh.pop %v559
      %v576 = vtanh.pop %v560
      %v577 = vmul.f32 %v339, %v561
      %v578 = vmul.f32 %v344, %v562
      %v579 = vmul.f32 %v349, %v563
      %v580 = vmul.f32 %v354, %v564
      %v581 = vmul.f32 %v359, %v565
      %v582 = vmul.f32 %v364, %v566
      %v583 = vmul.f32 %v369, %v567
      %v584 = vmul.f32 %v374, %v568
      %v585 = vmul.f32 %v379, %v569
      %v586 = vmul.f32 %v384, %v570
      %v587 = vmul.f32 %v389, %v571
      %v588 = vmul.f32 %v394, %v572
      %v589 = vmul.f32 %v399, %v573
      %v590 = vmul.f32 %v404, %v574
      %v591 = vmul.f32 %v409, %v575
      %v592 = vmul.f32 %v414, %v576
      %v593 = vld [vmem:[%s2] sm:$0x1]
      %v595 = vlaneseq
      %v596 = vshrl.u32 %v595, 7
      %v597 = vsub.s32 0, %v596
      %v598 = vrot.slane %v593, %v597
      %v600 = vmul.f32 %v577, %v598
      %v601 = vmul.f32 %v578, %v598
      %v602 = vmul.f32 %v579, %v598
      %v603 = vmul.f32 %v580, %v598
      %v604 = vmul.f32 %v581, %v598
      %v605 = vmul.f32 %v582, %v598
      %v606 = vmul.f32 %v583, %v598
      %v607 = vmul.f32 %v584, %v598
      %v608 = vmul.f32 %v585, %v598
      %v609 = vmul.f32 %v586, %v598
      %v610 = vmul.f32 %v587, %v598
      %v611 = vmul.f32 %v588, %v598
      %v612 = vmul.f32 %v589, %v598
      %v613 = vmul.f32 %v590, %v598
      %v614 = vmul.f32 %v591, %v598
      %v615 = vmul.f32 %v592, %v598
      %v616 = vld [vmem:[%s3] sm:$0x1]
      %v618 = vlaneseq
      %v619 = vshrl.u32 %v618, 7
      %v620 = vsub.s32 0, %v619
      %v621 = vrot.slane %v616, %v620
      %v623 = vadd.f32 %v600, %v621
      %v624 = vadd.f32 %v601, %v621
      %v625 = vadd.f32 %v602, %v621
      %v626 = vadd.f32 %v603, %v621
      %v627 = vadd.f32 %v604, %v621
      %v628 = vadd.f32 %v605, %v621
      %v629 = vadd.f32 %v606, %v621
      %v630 = vadd.f32 %v607, %v621
      %v631 = vadd.f32 %v608, %v621
      %v632 = vadd.f32 %v609, %v621
      %v633 = vadd.f32 %v610, %v621
      %v634 = vadd.f32 %v611, %v621
      %v635 = vadd.f32 %v612, %v621
      %v636 = vadd.f32 %v613, %v621
      %v637 = vadd.f32 %v614, %v621
      %v638 = vadd.f32 %v615, %v621
      %vm639 = vcmask 130048
      %640 = vst.msk [vmem:[%s199] sm:$0xff] %vm639, %v623
      %641 = vst.msk [vmem:[%s199 + $0x8] sm:$0xff] %vm639, %v624
      %642 = vst.msk [vmem:[%s199 + $0x10] sm:$0xff] %vm639, %v625
      %643 = vst.msk [vmem:[%s199 + $0x18] sm:$0xff] %vm639, %v626
      %644 = vst.msk [vmem:[%s199 + $0x20] sm:$0xff] %vm639, %v627
      %645 = vst.msk [vmem:[%s199 + $0x28] sm:$0xff] %vm639, %v628
      %646 = vst.msk [vmem:[%s199 + $0x30] sm:$0xff] %vm639, %v629
      %647 = vst.msk [vmem:[%s199 + $0x38] sm:$0xff] %vm639, %v630
      %648 = vst.msk [vmem:[%s199 + $0x40] sm:$0xff] %vm639, %v631
      %649 = vst.msk [vmem:[%s199 + $0x48] sm:$0xff] %vm639, %v632
      %650 = vst.msk [vmem:[%s199 + $0x50] sm:$0xff] %vm639, %v633
      %651 = vst.msk [vmem:[%s199 + $0x58] sm:$0xff] %vm639, %v634
      %652 = vst.msk [vmem:[%s199 + $0x60] sm:$0xff] %vm639, %v635
      %653 = vst.msk [vmem:[%s199 + $0x68] sm:$0xff] %vm639, %v636
      %654 = vst.msk [vmem:[%s199 + $0x70] sm:$0xff] %vm639, %v637
      %655 = vst.msk [vmem:[%s199 + $0x78] sm:$0xff] %vm639, %v638
      %s656 = smul.u32 16, %s15
      %p657 = scmp.lt.s32.totalorder %s656, 31
      %s658 = scalar_select %p657, %s656, 31
      %s659 = smul.addr %s658, 8
      %s660 = scalar_lea.vmem %s4, %s659
      // Predicated region
      $region37: #{tpu_custom_call.1} parent=35 // pred_check
        %p661 = pneg %p122
      $region38: #{tpu_custom_call.1} parent=35 // pred_check_branch
        %663 = sbr.rel (%p661) target = $region40
      $region39: #{tpu_custom_call.1} parent=35 // pred_region
        %s664 = smul.u32 16, %s15
      $region40: #{tpu_custom_call.1} parent=35 // pred_fallthru
        _
    $region36: #{tpu_custom_call.1} parent=5 // pred_fallthru
      _
    %p665 = scmp.le.s32.totalorder 2, %s10
    // Predicated region
    $region41: #{tpu_custom_call.1} parent=5 // pred_check
      %p666 = pneg %p665
    $region42: #{tpu_custom_call.1} parent=5 // pred_check_branch
      %668 = sbr.rel (%p666) target = $region44
    $region43: #{tpu_custom_call.1} parent=5 // pred_region
      %s669 = ssub.s32 %s10, 2
      // Predicated region
      $region45: #{tpu_custom_call.1} parent=43 // pred_check
        %p670 = pneg %p128
      $region46: #{tpu_custom_call.1} parent=43 // pred_check_branch
        %672 = sbr.rel (%p670) target = $region48
      $region47: #{tpu_custom_call.1} parent=43 // pred_region
        %s673 = smul.u32 16, %s16
        %p674 = scmp.lt.s32.totalorder %s673, 31
        %s675 = scalar_select %p674, %s673, 31
        %s676 = smul.addr %s675, 8
        %s677 = scalar_lea.vmem %s4, %s676
      $region48: #{tpu_custom_call.1} parent=43 // pred_fallthru
        _
    $region44: #{tpu_custom_call.1} parent=5 // pred_fallthru
      _
  $region6: #{tpu_custom_call.1} parent=0 // loop_footer
    %s14 = sadd.s32 1, %s10
  $region7: #{tpu_custom_call.1} parent=0 // loop_footer_branch
    %9 = sbr.rel target = $region3
  $region8: #{tpu_custom_call.1} parent=0 // loop_exit
    _

</llo_original>
